<compile_context>
chip_gen: v6e
topology: v6e:2x2x1
jax: 0.10.0
libtpu: 0.0.40
codegen_flags: <defaults>
</compile_context>

<pallas_src>
import functools
import math

import jax
import jax.numpy as jnp
from jax.experimental import pallas as pl
from jax.experimental.pallas import tpu as pltpu


_SQRT_2_OVER_PI = math.sqrt(2.0 / math.pi)


def _gelu_tanh(x):
    # tanh-approx GELU: routes the transcendental to the EUP slot.
    return 0.5 * x * (1.0 + jnp.tanh(_SQRT_2_OVER_PI * (x + 0.044715 * x * x * x)))


def _softplus(x):
    # Numerically stable softplus (same formula used in kernel and reference).
    return jnp.maximum(x, 0.0) + jnp.log(1.0 + jnp.exp(-jnp.abs(x)))


def _softmax_last(x):
    m = jnp.max(x, axis=-1, keepdims=True)
    e = jnp.exp(x - m)
    return e / jnp.sum(e, axis=-1, keepdims=True)


def _cde_kernel(temp_ref,                 # SMEM (1,) raw temperature parameter
                text_ref, image_ref,      # (bb, S, F) tiles
                wt_ref, bt_ref,           # fused text proj   (F, 2F), (1, 2F) = [Wq | We1_text]
                wi_ref, bi_ref,           # fused image proj  (F, 3F), (1, 3F) = [Wk | Wv | We1_img]
                we2_ref, be2_ref,         # emergence layer 2 (F, F), (1, F)
                wo_ref, bo_ref,           # attention out proj (F, F), (1, F)
                dist_ref, estate_ref):    # (bb, S, F) outputs
    bb, S, F = text_ref.shape

    # Collapse (bb, S) -> rows so each projection is one tall MXU matmul.
    t2 = text_ref[...].reshape(bb * S, F)
    i2 = image_ref[...].reshape(bb * S, F)

    tp = jnp.dot(t2, wt_ref[...], preferred_element_type=jnp.float32) + bt_ref[...]   # (bb*S, 2F)
    ip = jnp.dot(i2, wi_ref[...], preferred_element_type=jnp.float32) + bi_ref[...]   # (bb*S, 3F)

    q = tp[:, :F].reshape(bb, S, F)
    e_t = tp[:, F:]
    k = ip[:, :F].reshape(bb, S, F)
    v = ip[:, F:2 * F].reshape(bb, S, F)
    e_i = ip[:, 2 * F:]

    # emergence_core: Linear(2F->F) [split over streams] -> GELU -> Linear(F->F) -> softplus
    h = _gelu_tanh(e_t + e_i)
    e_pre = jnp.dot(h, we2_ref[...], preferred_element_type=jnp.float32) + be2_ref[...]
    estate = _softplus(e_pre)                                              # (bb*S, F), > 0

    # cross_attention: single-head scaled dot-product attention (text attends to image)
    scores = jnp.einsum('bqf,bkf->bqk', q, k,
                        preferred_element_type=jnp.float32) * (1.0 / math.sqrt(F))
    attn = _softmax_last(scores)
    ctx = jnp.einsum('bqk,bkf->bqf', attn, v,
                     preferred_element_type=jnp.float32).reshape(bb * S, F)
    attn_out = jnp.dot(ctx, wo_ref[...], preferred_element_type=jnp.float32) + bo_ref[...]

    # distribution = softmax(attn_output / (clamp(temperature, 0.001) * emergence_state))
    temp = jnp.maximum(temp_ref[0], 0.001)
    dist = _softmax_last(attn_out / (temp * estate))

    dist_ref[...] = dist.reshape(bb, S, F)
    estate_ref[...] = estate.reshape(bb, S, F)


@functools.partial(jax.jit, static_argnames=("bb",))
def critical_distribution_estimator(text, image, params, *, bb=1):
    """text, image: (B, S, F) float32.  Returns (distribution, emergence_state).

    `bb` = batches per grid step. Raise it for large B (tiles up to ~1k rows fit
    VMEM easily at F=32), but keep at least 2 grid steps so both v7x TCs work.
    """
    B, S, F = text.shape
    assert image.shape == (B, S, F)
    assert B % bb == 0

    (wq, bq, wk, bk, wv, bv, wo, bo,
     we1, be1, we2, be2, temperature) = params

    # Wrapper-side (constant-folded) weight fusion: one wide matmul per stream,
    # and the [text|image] concat becomes a split of We1 — no in-kernel concat.
    we1_t, we1_i = we1[:F], we1[F:]
    wt = jnp.concatenate([wq, we1_t], axis=1)                    # (F, 2F)
    bt = jnp.concatenate([bq, jnp.zeros_like(be1)], axis=1)      # (1, 2F)
    wi = jnp.concatenate([wk, wv, we1_i], axis=1)                # (F, 3F)
    bi = jnp.concatenate([bk, bv, be1], axis=1)                  # (1, 3F)
    temp = temperature.reshape(1).astype(jnp.float32)

    row_spec = pl.BlockSpec((bb, S, F), lambda i: (i, 0, 0))
    full = lambda shape: pl.BlockSpec(shape, lambda i: (0, 0))

    N = B * S
    flops = 2 * N * F * (2 * F + 3 * F + F + F) + 4 * B * S * S * F
    transcendentals = N * (3 * F + S)
    bytes_accessed = 4 * (4 * N * F + wt.size + wi.size + 2 * F * F + 8 * F)

    dist, estate = pl.pallas_call(
        _cde_kernel,
        out_shape=(jax.ShapeDtypeStruct((B, S, F), jnp.float32),
                   jax.ShapeDtypeStruct((B, S, F), jnp.float32)),
        grid_spec=pltpu.PrefetchScalarGridSpec(
            num_scalar_prefetch=0,
            grid=(B // bb,),
            in_specs=[
                pl.BlockSpec(memory_space=pltpu.MemorySpace.SMEM),  # temperature scalar
                row_spec,                  # text tile
                row_spec,                  # image tile
                full((F, 2 * F)), full((1, 2 * F)),   # fused text projection
                full((F, 3 * F)), full((1, 3 * F)),   # fused image projection
                full((F, F)), full((1, F)),           # emergence layer 2
                full((F, F)), full((1, F)),           # attention out projection
            ],
            out_specs=[row_spec, row_spec],
        ),
        compiler_params=pltpu.CompilerParams(
            dimension_semantics=("parallel",)),
        cost_estimate=pl.CostEstimate(flops=flops,
                                      transcendentals=transcendentals,
                                      bytes_accessed=bytes_accessed),
    )(temp, text, image, wt, bt, wi, bi, we2, be2, wo, bo)
    return dist, estate


def init_params(feature_dim, key):
    """Deterministic synthetic parameters for the injected submodules."""
    F = feature_dim
    ks = jax.random.split(key, 12)
    s = 0.08

    def lin(kw, kb, fan_in, fan_out):
        w = s * jax.random.normal(kw, (fan_in, fan_out), jnp.float32)
        b = 0.01 * jax.random.normal(kb, (1, fan_out), jnp.float32)
        return w, b

    wq, bq = lin(ks[0], ks[1], F, F)
    wk, bk = lin(ks[2], ks[3], F, F)
    wv, bv = lin(ks[4], ks[5], F, F)
    wo, bo = lin(ks[6], ks[7], F, F)
    we1, be1 = lin(ks[8], ks[9], 2 * F, F)
    we2, be2 = lin(ks[10], ks[11], F, F)
    temperature = jnp.full((1,), 0.1, jnp.float32)   # nn.Parameter(torch.ones(1) * 0.1)
    return (wq, bq, wk, bk, wv, bv, wo, bo, we1, be1, we2, be2, temperature)


def reference_forward(text, image, params):
    """Pure-JAX mirror of the PyTorch forward (unfused weights, explicit concat)."""
    (wq, bq, wk, bk, wv, bv, wo, bo, we1, be1, we2, be2, temperature) = params
    F = text.shape[-1]
    hp = jax.lax.Precision.HIGHEST
    x = jnp.concatenate([text, image], axis=-1)
    h = _gelu_tanh(jnp.dot(x, we1, precision=hp) + be1)
    estate = _softplus(jnp.dot(h, we2, precision=hp) + be2)
    q = jnp.dot(text, wq, precision=hp) + bq
    k = jnp.dot(image, wk, precision=hp) + bk
    v = jnp.dot(image, wv, precision=hp) + bv
    scores = jnp.einsum('bqf,bkf->bqk', q, k, precision=hp) / math.sqrt(F)
    attn = _softmax_last(scores)
    ctx = jnp.einsum('bqk,bkf->bqf', attn, v, precision=hp)
    attn_out = jnp.dot(ctx, wo, precision=hp) + bo
    temp = jnp.maximum(temperature, 0.001)
    dist = _softmax_last(attn_out / (temp * estate))
    return dist, estate


if __name__ == "__main__":
    B, S, F = 2, 8, 32          # batch, seq, feature_dim
    key = jax.random.PRNGKey(0)
    k_t, k_i, k_p = jax.random.split(key, 3)

    text_features = jax.random.normal(k_t, (B, S, F), jnp.float32)
    image_features = jax.random.normal(k_i, (B, S, F), jnp.float32)
    params = init_params(F, k_p)

    # bb=1 keeps 2 grid steps so both v7x TensorCores get work at this tiny B.
    distribution, emergence_state = critical_distribution_estimator(
        text_features, image_features, params, bb=1)
    jax.block_until_ready((distribution, emergence_state))

    dist_ref, estate_ref = reference_forward(text_features, image_features, params)
    assert jnp.allclose(distribution, dist_ref, atol=1e-4), "distribution mismatch vs reference"
    assert jnp.allclose(emergence_state, estate_ref, atol=1e-4), "emergence_state mismatch vs reference"
    assert jnp.allclose(jnp.sum(distribution, axis=-1), 1.0, atol=1e-5), "softmax not normalized"

    print("KERNEL_OK")
</pallas_src>

<mosaic_0001>
module attributes {stable_mosaic.version = 11 : i64} {
  func.func @_cde_kernel(%arg0: i32, %arg1: memref<1xf32, #tpu.memory_space<smem>>, %arg2: memref<1x8x32xf32, #tpu.memory_space<vmem>>, %arg3: memref<1x8x32xf32, #tpu.memory_space<vmem>>, %arg4: memref<32x64xf32, #tpu.memory_space<vmem>>, %arg5: memref<1x64xf32, #tpu.memory_space<vmem>>, %arg6: memref<32x96xf32, #tpu.memory_space<vmem>>, %arg7: memref<1x96xf32, #tpu.memory_space<vmem>>, %arg8: memref<32x32xf32, #tpu.memory_space<vmem>>, %arg9: memref<1x32xf32, #tpu.memory_space<vmem>>, %arg10: memref<32x32xf32, #tpu.memory_space<vmem>>, %arg11: memref<1x32xf32, #tpu.memory_space<vmem>>, %arg12: memref<1x8x32xf32, #tpu.memory_space<vmem>>, %arg13: memref<1x8x32xf32, #tpu.memory_space<vmem>>) attributes {dimension_semantics = [#tpu.dimension_semantics<parallel>], iteration_bounds = array<i64: 2>, scalar_prefetch = 0 : i64, scratch_operands = 0 : i64, tpu.core_type = #tpu.core_type<tc>, window_params = [{transform_indices = @transform_0, window_bounds = array<i64: 1>}, {transform_indices = @transform_1, window_bounds = array<i64: 1, 8, 32>}, {transform_indices = @transform_2, window_bounds = array<i64: 1, 8, 32>}, {pipeline_mode = #tpu.pipeline_mode<synchronous>, transform_indices = @transform_3, window_bounds = array<i64: 32, 64>}, {pipeline_mode = #tpu.pipeline_mode<synchronous>, transform_indices = @transform_4, window_bounds = array<i64: 1, 64>}, {pipeline_mode = #tpu.pipeline_mode<synchronous>, transform_indices = @transform_5, window_bounds = array<i64: 32, 96>}, {pipeline_mode = #tpu.pipeline_mode<synchronous>, transform_indices = @transform_6, window_bounds = array<i64: 1, 96>}, {pipeline_mode = #tpu.pipeline_mode<synchronous>, transform_indices = @transform_7, window_bounds = array<i64: 32, 32>}, {pipeline_mode = #tpu.pipeline_mode<synchronous>, transform_indices = @transform_8, window_bounds = array<i64: 1, 32>}, {pipeline_mode = #tpu.pipeline_mode<synchronous>, transform_indices = @transform_9, window_bounds = array<i64: 32, 32>}, {pipeline_mode = #tpu.pipeline_mode<synchronous>, transform_indices = @transform_10, window_bounds = array<i64: 1, 32>}, {transform_indices = @transform_11, window_bounds = array<i64: 1, 8, 32>}, {transform_indices = @transform_12, window_bounds = array<i64: 1, 8, 32>}]} {
    %c0 = arith.constant 0 : index
    %c0_0 = arith.constant 0 : index
    %c0_1 = arith.constant 0 : index
    %0 = vector.load %arg2[%c0, %c0_0, %c0_1] : memref<1x8x32xf32, #tpu.memory_space<vmem>>, vector<1x8x32xf32>
    %1 = vector.shape_cast %0 : vector<1x8x32xf32> to vector<8x32xf32>
    %c0_2 = arith.constant 0 : index
    %c0_3 = arith.constant 0 : index
    %c0_4 = arith.constant 0 : index
    %2 = vector.load %arg3[%c0_2, %c0_3, %c0_4] : memref<1x8x32xf32, #tpu.memory_space<vmem>>, vector<1x8x32xf32>
    %3 = vector.shape_cast %2 : vector<1x8x32xf32> to vector<8x32xf32>
    %c0_5 = arith.constant 0 : index
    %c0_6 = arith.constant 0 : index
    %4 = vector.load %arg4[%c0_5, %c0_6] : memref<32x64xf32, #tpu.memory_space<vmem>>, vector<32x64xf32>
    %cst = arith.constant dense<0.000000e+00> : vector<8x64xf32>
    %5 = tpu.matmul %1, %4, %cst {dimension_numbers = #tpu.dot_dimension_numbers<[1], [0], [0], [1], [0, 0, 1, 1], [], []>} : vector<8x32xf32>, vector<32x64xf32>, vector<8x64xf32> -> vector<8x64xf32>
    %c0_7 = arith.constant 0 : index
    %c0_8 = arith.constant 0 : index
    %6 = vector.load %arg5[%c0_7, %c0_8] : memref<1x64xf32, #tpu.memory_space<vmem>>, vector<1x64xf32>
    %7 = vector.broadcast %6 : vector<1x64xf32> to vector<8x64xf32>
    %8 = arith.addf %5, %7 : vector<8x64xf32>
    %c0_9 = arith.constant 0 : index
    %c0_10 = arith.constant 0 : index
    %9 = vector.load %arg6[%c0_9, %c0_10] : memref<32x96xf32, #tpu.memory_space<vmem>>, vector<32x96xf32>
    %cst_11 = arith.constant dense<0.000000e+00> : vector<8x96xf32>
    %10 = tpu.matmul %3, %9, %cst_11 {dimension_numbers = #tpu.dot_dimension_numbers<[1], [0], [0], [1], [0, 0, 1, 1], [], []>} : vector<8x32xf32>, vector<32x96xf32>, vector<8x96xf32> -> vector<8x96xf32>
    %c0_12 = arith.constant 0 : index
    %c0_13 = arith.constant 0 : index
    %11 = vector.load %arg7[%c0_12, %c0_13] : memref<1x96xf32, #tpu.memory_space<vmem>>, vector<1x96xf32>
    %12 = vector.broadcast %11 : vector<1x96xf32> to vector<8x96xf32>
    %13 = arith.addf %10, %12 : vector<8x96xf32>
    %14 = vector.extract_strided_slice %8 {offsets = [0, 0], sizes = [8, 32], strides = [1, 1]} : vector<8x64xf32> to vector<8x32xf32>
    %15 = vector.shape_cast %14 : vector<8x32xf32> to vector<1x8x32xf32>
    %16 = vector.extract_strided_slice %8 {offsets = [0, 32], sizes = [8, 32], strides = [1, 1]} : vector<8x64xf32> to vector<8x32xf32>
    %17 = vector.extract_strided_slice %13 {offsets = [0, 0], sizes = [8, 32], strides = [1, 1]} : vector<8x96xf32> to vector<8x32xf32>
    %18 = vector.shape_cast %17 : vector<8x32xf32> to vector<1x8x32xf32>
    %19 = vector.extract_strided_slice %13 {offsets = [0, 32], sizes = [8, 32], strides = [1, 1]} : vector<8x96xf32> to vector<8x32xf32>
    %20 = vector.shape_cast %19 : vector<8x32xf32> to vector<1x8x32xf32>
    %21 = vector.extract_strided_slice %13 {offsets = [0, 64], sizes = [8, 32], strides = [1, 1]} : vector<8x96xf32> to vector<8x32xf32>
    %22 = arith.addf %16, %21 : vector<8x32xf32>
    %cst_14 = arith.constant 5.000000e-01 : f32
    %23 = vector.broadcast %cst_14 : f32 to vector<8x32xf32>
    %24 = arith.mulf %23, %22 : vector<8x32xf32>
    %cst_15 = arith.constant 4.471500e-02 : f32
    %25 = vector.broadcast %cst_15 : f32 to vector<8x32xf32>
    %26 = arith.mulf %25, %22 : vector<8x32xf32>
    %27 = arith.mulf %26, %22 : vector<8x32xf32>
    %28 = arith.mulf %27, %22 : vector<8x32xf32>
    %29 = arith.addf %22, %28 : vector<8x32xf32>
    %cst_16 = arith.constant 0.797884583 : f32
    %30 = vector.broadcast %cst_16 : f32 to vector<8x32xf32>
    %31 = arith.mulf %30, %29 : vector<8x32xf32>
    %32 = math.tanh %31 : vector<8x32xf32>
    %cst_17 = arith.constant 1.000000e+00 : f32
    %33 = vector.broadcast %cst_17 : f32 to vector<8x32xf32>
    %34 = arith.addf %33, %32 : vector<8x32xf32>
    %35 = arith.mulf %24, %34 : vector<8x32xf32>
    %c0_18 = arith.constant 0 : index
    %c0_19 = arith.constant 0 : index
    %36 = vector.load %arg8[%c0_18, %c0_19] : memref<32x32xf32, #tpu.memory_space<vmem>>, vector<32x32xf32>
    %cst_20 = arith.constant dense<0.000000e+00> : vector<8x32xf32>
    %37 = tpu.matmul %35, %36, %cst_20 {dimension_numbers = #tpu.dot_dimension_numbers<[1], [0], [0], [1], [0, 0, 1, 1], [], []>} : vector<8x32xf32>, vector<32x32xf32>, vector<8x32xf32> -> vector<8x32xf32>
    %c0_21 = arith.constant 0 : index
    %c0_22 = arith.constant 0 : index
    %38 = vector.load %arg9[%c0_21, %c0_22] : memref<1x32xf32, #tpu.memory_space<vmem>>, vector<1x32xf32>
    %39 = vector.broadcast %38 : vector<1x32xf32> to vector<8x32xf32>
    %40 = arith.addf %37, %39 : vector<8x32xf32>
    %cst_23 = arith.constant 0.000000e+00 : f32
    %41 = vector.broadcast %cst_23 : f32 to vector<8x32xf32>
    %42 = arith.maximumf %40, %41 : vector<8x32xf32>
    %43 = math.absf %40 : vector<8x32xf32>
    %cst_24 = arith.constant 0.000000e+00 : f32
    %44 = vector.broadcast %cst_24 : f32 to vector<8x32xf32>
    %45 = arith.subf %44, %43 : vector<8x32xf32>
    %46 = math.exp %45 : vector<8x32xf32>
    %cst_25 = arith.constant 1.000000e+00 : f32
    %47 = vector.broadcast %cst_25 : f32 to vector<8x32xf32>
    %48 = arith.addf %47, %46 : vector<8x32xf32>
    %49 = math.log %48 : vector<8x32xf32>
    %50 = arith.addf %42, %49 : vector<8x32xf32>
    "tpu.trace_start"() <{level = 10 : i32, message = "bqf,bkf->bqk"}> : () -> ()
    %cst_26 = arith.constant dense<0.000000e+00> : vector<1x8x8xf32>
    %51 = tpu.matmul %15, %18, %cst_26 {dimension_numbers = #tpu.dot_dimension_numbers<[2], [2], [1], [1], [0, 0, 0, 1, 1, 1], [0], [0]>} : vector<1x8x32xf32>, vector<1x8x32xf32>, vector<1x8x8xf32> -> vector<1x8x8xf32>
    "tpu.trace_stop"() : () -> ()
    %cst_27 = arith.constant 0.176776692 : f32
    %52 = vector.broadcast %cst_27 : f32 to vector<1x8x8xf32>
    %53 = arith.mulf %51, %52 : vector<1x8x8xf32>
    %cst_28 = arith.constant dense<0xFF800000> : vector<1x8xf32>
    %54 = vector.multi_reduction <maximumf>, %53, %cst_28 [2] : vector<1x8x8xf32> to vector<1x8xf32>
    %55 = vector.shape_cast %54 : vector<1x8xf32> to vector<1x8x1xf32>
    %56 = vector.broadcast %55 : vector<1x8x1xf32> to vector<1x8x8xf32>
    %57 = arith.subf %53, %56 : vector<1x8x8xf32>
    %58 = math.exp %57 : vector<1x8x8xf32>
    %cst_29 = arith.constant dense<0.000000e+00> : vector<1x8xf32>
    %59 = vector.multi_reduction <add>, %58, %cst_29 [2] : vector<1x8x8xf32> to vector<1x8xf32>
    %60 = vector.shape_cast %59 : vector<1x8xf32> to vector<1x8x1xf32>
    %61 = vector.broadcast %60 : vector<1x8x1xf32> to vector<1x8x8xf32>
    %62 = arith.divf %58, %61 : vector<1x8x8xf32>
    "tpu.trace_start"() <{level = 10 : i32, message = "bqk,bkf->bqf"}> : () -> ()
    %cst_30 = arith.constant dense<0.000000e+00> : vector<1x8x32xf32>
    %63 = tpu.matmul %62, %20, %cst_30 {dimension_numbers = #tpu.dot_dimension_numbers<[2], [1], [1], [2], [0, 0, 0, 1, 1, 2], [0], [0]>} : vector<1x8x8xf32>, vector<1x8x32xf32>, vector<1x8x32xf32> -> vector<1x8x32xf32>
    "tpu.trace_stop"() : () -> ()
    %64 = vector.shape_cast %63 : vector<1x8x32xf32> to vector<8x32xf32>
    %c0_31 = arith.constant 0 : index
    %c0_32 = arith.constant 0 : index
    %65 = vector.load %arg10[%c0_31, %c0_32] : memref<32x32xf32, #tpu.memory_space<vmem>>, vector<32x32xf32>
    %cst_33 = arith.constant dense<0.000000e+00> : vector<8x32xf32>
    %66 = tpu.matmul %64, %65, %cst_33 {dimension_numbers = #tpu.dot_dimension_numbers<[1], [0], [0], [1], [0, 0, 1, 1], [], []>} : vector<8x32xf32>, vector<32x32xf32>, vector<8x32xf32> -> vector<8x32xf32>
    %c0_34 = arith.constant 0 : index
    %c0_35 = arith.constant 0 : index
    %67 = vector.load %arg11[%c0_34, %c0_35] : memref<1x32xf32, #tpu.memory_space<vmem>>, vector<1x32xf32>
    %68 = vector.broadcast %67 : vector<1x32xf32> to vector<8x32xf32>
    %69 = arith.addf %66, %68 : vector<8x32xf32>
    %c0_36 = arith.constant 0 : index
    %70 = memref.load %arg1[%c0_36] : memref<1xf32, #tpu.memory_space<smem>>
    %cst_37 = arith.constant 1.000000e-03 : f32
    %71 = arith.maximumf %70, %cst_37 : f32
    %72 = vector.broadcast %71 : f32 to vector<8x32xf32>
    %73 = arith.mulf %72, %50 : vector<8x32xf32>
    %74 = arith.divf %69, %73 : vector<8x32xf32>
    %cst_38 = arith.constant dense<0xFF800000> : vector<8xf32>
    %75 = vector.multi_reduction <maximumf>, %74, %cst_38 [1] : vector<8x32xf32> to vector<8xf32>
    %76 = vector.shape_cast %75 : vector<8xf32> to vector<8x1xf32>
    %77 = vector.broadcast %76 : vector<8x1xf32> to vector<8x32xf32>
    %78 = arith.subf %74, %77 : vector<8x32xf32>
    %79 = math.exp %78 : vector<8x32xf32>
    %cst_39 = arith.constant dense<0.000000e+00> : vector<8xf32>
    %80 = vector.multi_reduction <add>, %79, %cst_39 [1] : vector<8x32xf32> to vector<8xf32>
    %81 = vector.shape_cast %80 : vector<8xf32> to vector<8x1xf32>
    %82 = vector.broadcast %81 : vector<8x1xf32> to vector<8x32xf32>
    %83 = arith.divf %79, %82 : vector<8x32xf32>
    %84 = vector.shape_cast %83 : vector<8x32xf32> to vector<1x8x32xf32>
    %c0_40 = arith.constant 0 : index
    %c0_41 = arith.constant 0 : index
    %c0_42 = arith.constant 0 : index
    %85 = vector.load %arg12[%c0_40, %c0_41, %c0_42] : memref<1x8x32xf32, #tpu.memory_space<vmem>>, vector<1x8x32xf32>
    tpu.vector_store %arg12[%c0_40, %c0_41, %c0_42], %84 {strides = array<i32>} : memref<1x8x32xf32, #tpu.memory_space<vmem>>, vector<1x8x32xf32>,
    %86 = vector.shape_cast %50 : vector<8x32xf32> to vector<1x8x32xf32>
    %c0_43 = arith.constant 0 : index
    %c0_44 = arith.constant 0 : index
    %c0_45 = arith.constant 0 : index
    %87 = vector.load %arg13[%c0_43, %c0_44, %c0_45] : memref<1x8x32xf32, #tpu.memory_space<vmem>>, vector<1x8x32xf32>
    tpu.vector_store %arg13[%c0_43, %c0_44, %c0_45], %86 {strides = array<i32>} : memref<1x8x32xf32, #tpu.memory_space<vmem>>, vector<1x8x32xf32>,
    return
  }
  func.func @transform_0(%arg0: i32) -> i32 {
    %c0_i32 = arith.constant 0 : i32
    %c0_i32_0 = arith.constant 0 : i32
    return %c0_i32 : i32
  }
  func.func @transform_1(%arg0: i32) -> (i32, i32, i32) {
    %c0_i32 = arith.constant 0 : i32
    %c0_i32_0 = arith.constant 0 : i32
    %c0_i32_1 = arith.constant 0 : i32
    return %arg0, %c0_i32, %c0_i32_0 : i32, i32, i32
  }
  func.func @transform_2(%arg0: i32) -> (i32, i32, i32) {
    %c0_i32 = arith.constant 0 : i32
    %c0_i32_0 = arith.constant 0 : i32
    %c0_i32_1 = arith.constant 0 : i32
    return %arg0, %c0_i32, %c0_i32_0 : i32, i32, i32
  }
  func.func @transform_3(%arg0: i32) -> (i32, i32) {
    %c0_i32 = arith.constant 0 : i32
    %c0_i32_0 = arith.constant 0 : i32
    %c0_i32_1 = arith.constant 0 : i32
    return %c0_i32, %c0_i32_0 : i32, i32
  }
  func.func @transform_4(%arg0: i32) -> (i32, i32) {
    %c0_i32 = arith.constant 0 : i32
    %c0_i32_0 = arith.constant 0 : i32
    %c0_i32_1 = arith.constant 0 : i32
    return %c0_i32, %c0_i32_0 : i32, i32
  }
  func.func @transform_5(%arg0: i32) -> (i32, i32) {
    %c0_i32 = arith.constant 0 : i32
    %c0_i32_0 = arith.constant 0 : i32
    %c0_i32_1 = arith.constant 0 : i32
    return %c0_i32, %c0_i32_0 : i32, i32
  }
  func.func @transform_6(%arg0: i32) -> (i32, i32) {
    %c0_i32 = arith.constant 0 : i32
    %c0_i32_0 = arith.constant 0 : i32
    %c0_i32_1 = arith.constant 0 : i32
    return %c0_i32, %c0_i32_0 : i32, i32
  }
  func.func @transform_7(%arg0: i32) -> (i32, i32) {
    %c0_i32 = arith.constant 0 : i32
    %c0_i32_0 = arith.constant 0 : i32
    %c0_i32_1 = arith.constant 0 : i32
    return %c0_i32, %c0_i32_0 : i32, i32
  }
  func.func @transform_8(%arg0: i32) -> (i32, i32) {
    %c0_i32 = arith.constant 0 : i32
    %c0_i32_0 = arith.constant 0 : i32
    %c0_i32_1 = arith.constant 0 : i32
    return %c0_i32, %c0_i32_0 : i32, i32
  }
  func.func @transform_9(%arg0: i32) -> (i32, i32) {
    %c0_i32 = arith.constant 0 : i32
    %c0_i32_0 = arith.constant 0 : i32
    %c0_i32_1 = arith.constant 0 : i32
    return %c0_i32, %c0_i32_0 : i32, i32
  }
  func.func @transform_10(%arg0: i32) -> (i32, i32) {
    %c0_i32 = arith.constant 0 : i32
    %c0_i32_0 = arith.constant 0 : i32
    %c0_i32_1 = arith.constant 0 : i32
    return %c0_i32, %c0_i32_0 : i32, i32
  }
  func.func @transform_11(%arg0: i32) -> (i32, i32, i32) {
    %c0_i32 = arith.constant 0 : i32
    %c0_i32_0 = arith.constant 0 : i32
    %c0_i32_1 = arith.constant 0 : i32
    return %arg0, %c0_i32, %c0_i32_0 : i32, i32, i32
  }
  func.func @transform_12(%arg0: i32) -> (i32, i32, i32) {
    %c0_i32 = arith.constant 0 : i32
    %c0_i32_0 = arith.constant 0 : i32
    %c0_i32_1 = arith.constant 0 : i32
    return %arg0, %c0_i32, %c0_i32_0 : i32, i32, i32
  }
}

</mosaic_0001>

<llo_original>
// kernel: critical_distribution_estimator.1
$region0: #{critical_distribution_estimator.1}
  #allocation0 [shape = 'u32[]', space=smem, size = 0x4, offset = 0x4, fixed_abs, tag = 'smem constant byte address 0x4 - core index']
  #allocation1 [shape = 'u32[144,128]{1,0:T(1,128)}', space=vmem, size = 0x12000, scoped, tag = 'internal scratch']
  #allocation2 [shape = 'f32[1]{0:T(128)S(6)}', space=smem, size = 0x200, scoped, tag = 'scoped memory for critical_distribution_estimator.1']
  %s0 = inlined_call_operand.<no memory space> [shape: f32[1], index: 0, kind: input, shape index: {}]
  %s1 = inlined_call_operand.vmem [shape: f32[2,8,32], index: 1, kind: input, shape index: {}]
  %s2 = inlined_call_operand.vmem [shape: f32[2,8,32], index: 2, kind: input, shape index: {}]
  %s3 = inlined_call_operand.vmem [shape: f32[32,64], index: 3, kind: input, shape index: {}]
  %s4 = inlined_call_operand.vmem [shape: f32[1,64], index: 4, kind: input, shape index: {}]
  %s5 = inlined_call_operand.vmem [shape: f32[32,96], index: 5, kind: input, shape index: {}]
  %s6 = inlined_call_operand.vmem [shape: f32[1,96], index: 6, kind: input, shape index: {}]
  %s7 = inlined_call_operand.vmem [shape: f32[32,32], index: 7, kind: input, shape index: {}]
  %s8 = inlined_call_operand.vmem [shape: f32[1,32], index: 8, kind: input, shape index: {}]
  %s9 = inlined_call_operand.vmem [shape: f32[32,32], index: 9, kind: input, shape index: {}]
  %s10 = inlined_call_operand.vmem [shape: f32[1,32], index: 10, kind: input, shape index: {}]
  %s11 = inlined_call_operand.hbm [shape: f32[2,8,32], index: 11, kind: output, shape index: {0}]
  %s12 = inlined_call_operand.hbm [shape: f32[2,8,32], index: 12, kind: output, shape index: {1}]
  %13 = xla_tuple %s11, %s12
  %s14 = sld [smem:[#allocation0]]
  $region85: #{critical_distribution_estimator.1} parent=0
    _
  %s16 = ssub.s32 1, %s14
  %s17 = scalar_select 0, %s16, %s14
  %18 = sst [smem:[#allocation2]] %s0
  $region1: #{critical_distribution_estimator.1} parent=0
    #allocation3 [shape = 'u8[8192]{0}', space=vmem, size = 0x2000, scoped, tag = 'output window, operand 0']
    #allocation4 [shape = 's32[2]{0}', space=sflag, size = 0x8, scoped, tag = 'scoped memory for critical_distribution_estimator.1']
    #allocation5 [shape = 'u8[8192]{0}', space=vmem, size = 0x2000, scoped, tag = 'output window, operand 1']
    #allocation6 [shape = 's32[2]{0}', space=sflag, size = 0x8, scoped, tag = 'scoped memory for critical_distribution_estimator.1']
    %19 = vsyncpa [#allocation4], 0
    %s20 = scalar_lea.sflag [#allocation4], 1
    %21 = vsyncpa %s20, 0
    %22 = vsyncpa [#allocation6], 0
    %s23 = scalar_lea.sflag [#allocation6], 1
    %24 = vsyncpa %s23, 0
    loop: start=0, step=1, limit=4
    $region2: #{critical_distribution_estimator.1} parent=1 // loop_pre_header
      _
    $region3: #{critical_distribution_estimator.1} parent=1 // loop_header
      %s26 = sphi 0, %s30
      %p27 = scmp.ge.s32.totalorder %s26, 4
      %s34 = sphi 0, %s34
      %s36 = sphi 0, %s34
      %s37 = sphi 0, %s36
      %s51 = sphi 0, %s37
      %s57 = sphi 0, %s59
      %s60 = sphi 0, %s57
      %s61 = sphi 0, %s60
      %s77 = sphi 0, %s61
      %s83 = sphi 0, %s85
      %s86 = sphi 0, %s83
      %s87 = sphi 0, %s86
      %s103 = sphi 0, %s87
      %s107 = sphi 0, %s107
      %s109 = sphi 0, %s107
      %s110 = sphi 0, %s109
      %s124 = sphi 0, %s110
      %s128 = sphi 0, %s128
      %s130 = sphi 0, %s128
      %s131 = sphi 0, %s130
      %s145 = sphi 0, %s131
      %s149 = sphi 0, %s149
      %s151 = sphi 0, %s149
      %s152 = sphi 0, %s151
      %s166 = sphi 0, %s152
      %s170 = sphi 0, %s170
      %s172 = sphi 0, %s170
      %s173 = sphi 0, %s172
      %s187 = sphi 0, %s173
      %s191 = sphi 0, %s191
      %s193 = sphi 0, %s191
      %s194 = sphi 0, %s193
      %s208 = sphi 0, %s194
      %s212 = sphi 0, %s212
      %s214 = sphi 0, %s212
      %s215 = sphi 0, %s214
      %s229 = sphi 0, %s215
      %s233 = sphi 0, %s233
      %s235 = sphi 0, %s233
      %s236 = sphi 0, %s235
      %s250 = sphi 0, %s236
      %s254 = sphi 0, %s254
      %s256 = sphi 0, %s254
      %s257 = sphi 0, %s256
      %s271 = sphi 0, %s257
      %s277 = sphi 0, %s279
      %s280 = sphi 0, %s277
      %s281 = sphi 0, %s280
      %s297 = sphi 0, %s281
      %s303 = sphi 0, %s305
      %s306 = sphi 0, %s303
      %s307 = sphi 0, %s306
      %s323 = sphi 0, %s307
    $region4: #{critical_distribution_estimator.1} parent=1 // loop_header_branch
      %29 = sbr.rel (%p27) target = $region8
    $region5: #{critical_distribution_estimator.1} parent=1 // loop_body
      %s31 = ssub.s32 %s26, 1
      %s32 = ssub.s32 %s26, 2
      %s33 = sadd.s32 %s26, 1
      %s35 = sadd.s32 %s34, 1
      %p38 = scmp.eq.s32.totalorder %s26, 1
      %p39 = scmp.ne.s32.totalorder %s34, %s36
      %p40 = scmp.eq.s32.totalorder %s26, 0
      %p41 = por %p39, %p40
      %p42 = scmp.ne.s32.totalorder %s34, %s36
      %p43 = scmp.eq.s32.totalorder %s31, 1
      %p44 = por %p42, %p43
      %p45 = scmp.ne.s32.totalorder %s36, %s37
      %p46 = scmp.eq.s32.totalorder %s31, 0
      %p47 = por %p45, %p46
      %p48 = scmp.ne.s32.totalorder %s36, %s37
      %p49 = scmp.eq.s32.totalorder %s32, 1
      %p50 = por %p48, %p49
      %p52 = scmp.ne.s32.totalorder %s37, %s51
      %p53 = scmp.eq.s32.totalorder %s32, 0
      %p54 = por %p52, %p53
      %s55 = ssub.s32 %s26, %s33
      %p56 = scmp.eq.s32.totalorder %s55, 0
      %s58 = sadd.s32 %s57, 1
      %s59 = scalar_select %p56, %s57, %s58
      %p62 = pneg %p56
      %p63 = scmp.eq.s32.totalorder %s26, 1
      %p64 = por %p62, %p63
      %p65 = scmp.ne.s32.totalorder %s57, %s60
      %p66 = scmp.eq.s32.totalorder %s26, 0
      %p67 = por %p65, %p66
      %p68 = scmp.ne.s32.totalorder %s57, %s60
      %p69 = scmp.eq.s32.totalorder %s31, 1
      %p70 = por %p68, %p69
      %p71 = scmp.ne.s32.totalorder %s60, %s61
      %p72 = scmp.eq.s32.totalorder %s31, 0
      %p73 = por %p71, %p72
      %p74 = scmp.ne.s32.totalorder %s60, %s61
      %p75 = scmp.eq.s32.totalorder %s32, 1
      %p76 = por %p74, %p75
      %p78 = scmp.ne.s32.totalorder %s61, %s77
      %p79 = scmp.eq.s32.totalorder %s32, 0
      %p80 = por %p78, %p79
      %s81 = ssub.s32 %s26, %s33
      %p82 = scmp.eq.s32.totalorder %s81, 0
      %s84 = sadd.s32 %s83, 1
      %s85 = scalar_select %p82, %s83, %s84
      %p88 = pneg %p82
      %p89 = scmp.eq.s32.totalorder %s26, 1
      %p90 = por %p88, %p89
      %p91 = scmp.ne.s32.totalorder %s83, %s86
      %p92 = scmp.eq.s32.totalorder %s26, 0
      %p93 = por %p91, %p92
      %p94 = scmp.ne.s32.totalorder %s83, %s86
      %p95 = scmp.eq.s32.totalorder %s31, 1
      %p96 = por %p94, %p95
      %p97 = scmp.ne.s32.totalorder %s86, %s87
      %p98 = scmp.eq.s32.totalorder %s31, 0
      %p99 = por %p97, %p98
      %p100 = scmp.ne.s32.totalorder %s86, %s87
      %p101 = scmp.eq.s32.totalorder %s32, 1
      %p102 = por %p100, %p101
      %p104 = scmp.ne.s32.totalorder %s87, %s103
      %p105 = scmp.eq.s32.totalorder %s32, 0
      %p106 = por %p104, %p105
      %s108 = sadd.s32 %s107, 1
      %p111 = scmp.eq.s32.totalorder %s26, 1
      %p112 = scmp.ne.s32.totalorder %s107, %s109
      %p113 = scmp.eq.s32.totalorder %s26, 0
      %p114 = por %p112, %p113
      %p115 = scmp.ne.s32.totalorder %s107, %s109
      %p116 = scmp.eq.s32.totalorder %s31, 1
      %p117 = por %p115, %p116
      %p118 = scmp.ne.s32.totalorder %s109, %s110
      %p119 = scmp.eq.s32.totalorder %s31, 0
      %p120 = por %p118, %p119
      %p121 = scmp.ne.s32.totalorder %s109, %s110
      %p122 = scmp.eq.s32.totalorder %s32, 1
      %p123 = por %p121, %p122
      %p125 = scmp.ne.s32.totalorder %s110, %s124
      %p126 = scmp.eq.s32.totalorder %s32, 0
      %p127 = por %p125, %p126
      %s129 = sadd.s32 %s128, 1
      %p132 = scmp.eq.s32.totalorder %s26, 1
      %p133 = scmp.ne.s32.totalorder %s128, %s130
      %p134 = scmp.eq.s32.totalorder %s26, 0
      %p135 = por %p133, %p134
      %p136 = scmp.ne.s32.totalorder %s128, %s130
      %p137 = scmp.eq.s32.totalorder %s31, 1
      %p138 = por %p136, %p137
      %p139 = scmp.ne.s32.totalorder %s130, %s131
      %p140 = scmp.eq.s32.totalorder %s31, 0
      %p141 = por %p139, %p140
      %p142 = scmp.ne.s32.totalorder %s130, %s131
      %p143 = scmp.eq.s32.totalorder %s32, 1
      %p144 = por %p142, %p143
      %p146 = scmp.ne.s32.totalorder %s131, %s145
      %p147 = scmp.eq.s32.totalorder %s32, 0
      %p148 = por %p146, %p147
      %s150 = sadd.s32 %s149, 1
      %p153 = scmp.eq.s32.totalorder %s26, 1
      %p154 = scmp.ne.s32.totalorder %s149, %s151
      %p155 = scmp.eq.s32.totalorder %s26, 0
      %p156 = por %p154, %p155
      %p157 = scmp.ne.s32.totalorder %s149, %s151
      %p158 = scmp.eq.s32.totalorder %s31, 1
      %p159 = por %p157, %p158
      %p160 = scmp.ne.s32.totalorder %s151, %s152
      %p161 = scmp.eq.s32.totalorder %s31, 0
      %p162 = por %p160, %p161
      %p163 = scmp.ne.s32.totalorder %s151, %s152
      %p164 = scmp.eq.s32.totalorder %s32, 1
      %p165 = por %p163, %p164
      %p167 = scmp.ne.s32.totalorder %s152, %s166
      %p168 = scmp.eq.s32.totalorder %s32, 0
      %p169 = por %p167, %p168
      %s171 = sadd.s32 %s170, 1
      %p174 = scmp.eq.s32.totalorder %s26, 1
      %p175 = scmp.ne.s32.totalorder %s170, %s172
      %p176 = scmp.eq.s32.totalorder %s26, 0
      %p177 = por %p175, %p176
      %p178 = scmp.ne.s32.totalorder %s170, %s172
      %p179 = scmp.eq.s32.totalorder %s31, 1
      %p180 = por %p178, %p179
      %p181 = scmp.ne.s32.totalorder %s172, %s173
      %p182 = scmp.eq.s32.totalorder %s31, 0
      %p183 = por %p181, %p182
      %p184 = scmp.ne.s32.totalorder %s172, %s173
      %p185 = scmp.eq.s32.totalorder %s32, 1
      %p186 = por %p184, %p185
      %p188 = scmp.ne.s32.totalorder %s173, %s187
      %p189 = scmp.eq.s32.totalorder %s32, 0
      %p190 = por %p188, %p189
      %s192 = sadd.s32 %s191, 1
      %p195 = scmp.eq.s32.totalorder %s26, 1
      %p196 = scmp.ne.s32.totalorder %s191, %s193
      %p197 = scmp.eq.s32.totalorder %s26, 0
      %p198 = por %p196, %p197
      %p199 = scmp.ne.s32.totalorder %s191, %s193
      %p200 = scmp.eq.s32.totalorder %s31, 1
      %p201 = por %p199, %p200
      %p202 = scmp.ne.s32.totalorder %s193, %s194
      %p203 = scmp.eq.s32.totalorder %s31, 0
      %p204 = por %p202, %p203
      %p205 = scmp.ne.s32.totalorder %s193, %s194
      %p206 = scmp.eq.s32.totalorder %s32, 1
      %p207 = por %p205, %p206
      %p209 = scmp.ne.s32.totalorder %s194, %s208
      %p210 = scmp.eq.s32.totalorder %s32, 0
      %p211 = por %p209, %p210
      %s213 = sadd.s32 %s212, 1
      %p216 = scmp.eq.s32.totalorder %s26, 1
      %p217 = scmp.ne.s32.totalorder %s212, %s214
      %p218 = scmp.eq.s32.totalorder %s26, 0
      %p219 = por %p217, %p218
      %p220 = scmp.ne.s32.totalorder %s212, %s214
      %p221 = scmp.eq.s32.totalorder %s31, 1
      %p222 = por %p220, %p221
      %p223 = scmp.ne.s32.totalorder %s214, %s215
      %p224 = scmp.eq.s32.totalorder %s31, 0
      %p225 = por %p223, %p224
      %p226 = scmp.ne.s32.totalorder %s214, %s215
      %p227 = scmp.eq.s32.totalorder %s32, 1
      %p228 = por %p226, %p227
      %p230 = scmp.ne.s32.totalorder %s215, %s229
      %p231 = scmp.eq.s32.totalorder %s32, 0
      %p232 = por %p230, %p231
      %s234 = sadd.s32 %s233, 1
      %p237 = scmp.eq.s32.totalorder %s26, 1
      %p238 = scmp.ne.s32.totalorder %s233, %s235
      %p239 = scmp.eq.s32.totalorder %s26, 0
      %p240 = por %p238, %p239
      %p241 = scmp.ne.s32.totalorder %s233, %s235
      %p242 = scmp.eq.s32.totalorder %s31, 1
      %p243 = por %p241, %p242
      %p244 = scmp.ne.s32.totalorder %s235, %s236
      %p245 = scmp.eq.s32.totalorder %s31, 0
      %p246 = por %p244, %p245
      %p247 = scmp.ne.s32.totalorder %s235, %s236
      %p248 = scmp.eq.s32.totalorder %s32, 1
      %p249 = por %p247, %p248
      %p251 = scmp.ne.s32.totalorder %s236, %s250
      %p252 = scmp.eq.s32.totalorder %s32, 0
      %p253 = por %p251, %p252
      %s255 = sadd.s32 %s254, 1
      %p258 = scmp.eq.s32.totalorder %s26, 1
      %p259 = scmp.ne.s32.totalorder %s254, %s256
      %p260 = scmp.eq.s32.totalorder %s26, 0
      %p261 = por %p259, %p260
      %p262 = scmp.ne.s32.totalorder %s254, %s256
      %p263 = scmp.eq.s32.totalorder %s31, 1
      %p264 = por %p262, %p263
      %p265 = scmp.ne.s32.totalorder %s256, %s257
      %p266 = scmp.eq.s32.totalorder %s31, 0
      %p267 = por %p265, %p266
      %p268 = scmp.ne.s32.totalorder %s256, %s257
      %p269 = scmp.eq.s32.totalorder %s32, 1
      %p270 = por %p268, %p269
      %p272 = scmp.ne.s32.totalorder %s257, %s271
      %p273 = scmp.eq.s32.totalorder %s32, 0
      %p274 = por %p272, %p273
      %s275 = ssub.s32 %s26, %s33
      %p276 = scmp.eq.s32.totalorder %s275, 0
      %s278 = sadd.s32 %s277, 1
      %s279 = scalar_select %p276, %s277, %s278
      %p282 = pneg %p276
      %p283 = scmp.eq.s32.totalorder %s26, 1
      %p284 = por %p282, %p283
      %p285 = scmp.ne.s32.totalorder %s277, %s280
      %p286 = scmp.eq.s32.totalorder %s26, 0
      %p287 = por %p285, %p286
      %p288 = scmp.ne.s32.totalorder %s277, %s280
      %p289 = scmp.eq.s32.totalorder %s31, 1
      %p290 = por %p288, %p289
      %p291 = scmp.ne.s32.totalorder %s280, %s281
      %p292 = scmp.eq.s32.totalorder %s31, 0
      %p293 = por %p291, %p292
      %p294 = scmp.ne.s32.totalorder %s280, %s281
      %p295 = scmp.eq.s32.totalorder %s32, 1
      %p296 = por %p294, %p295
      %p298 = scmp.ne.s32.totalorder %s281, %s297
      %p299 = scmp.eq.s32.totalorder %s32, 0
      %p300 = por %p298, %p299
      %s301 = ssub.s32 %s26, %s33
      %p302 = scmp.eq.s32.totalorder %s301, 0
      %s304 = sadd.s32 %s303, 1
      %s305 = scalar_select %p302, %s303, %s304
      %p308 = pneg %p302
      %p309 = scmp.eq.s32.totalorder %s26, 1
      %p310 = por %p308, %p309
      %p311 = scmp.ne.s32.totalorder %s303, %s306
      %p312 = scmp.eq.s32.totalorder %s26, 0
      %p313 = por %p311, %p312
      %p314 = scmp.ne.s32.totalorder %s303, %s306
      %p315 = scmp.eq.s32.totalorder %s31, 1
      %p316 = por %p314, %p315
      %p317 = scmp.ne.s32.totalorder %s306, %s307
      %p318 = scmp.eq.s32.totalorder %s31, 0
      %p319 = por %p317, %p318
      %p320 = scmp.ne.s32.totalorder %s306, %s307
      %p321 = scmp.eq.s32.totalorder %s32, 1
      %p322 = por %p320, %p321
      %p324 = scmp.ne.s32.totalorder %s307, %s323
      %p325 = scmp.eq.s32.totalorder %s32, 0
      %p326 = por %p324, %p325
      %p327 = scmp.le.s32.totalorder 1, %s26
      %p328 = scmp.lt.s32.totalorder %s26, 3
      %p329 = pnand %p327, %p328
      %p330 = pneg %p329
      // Predicated region
      $region9: #{critical_distribution_estimator.1} parent=5 // pred_check
        _
      $region10: #{critical_distribution_estimator.1} parent=5 // pred_check_branch
        %332 = sbr.rel (%p329) target = $region12
      $region11: #{critical_distribution_estimator.1} parent=5 // pred_region
        %s333 = ssub.s32 %s26, 1
        // Predicated region
        $region13: #{critical_distribution_estimator.1} parent=11 // pred_check
          %p334 = pneg %p47
        $region14: #{critical_distribution_estimator.1} parent=11 // pred_check_branch
          %336 = sbr.rel (%p334) target = $region16
        $region15: #{critical_distribution_estimator.1} parent=11 // pred_region
          _
        $region16: #{critical_distribution_estimator.1} parent=11 // pred_fallthru
          _
        // Predicated region
        $region17: #{critical_distribution_estimator.1} parent=11 // pred_check
          %p337 = pneg %p120
        $region18: #{critical_distribution_estimator.1} parent=11 // pred_check_branch
          %339 = sbr.rel (%p337) target = $region20
        $region19: #{critical_distribution_estimator.1} parent=11 // pred_region
          _
        $region20: #{critical_distribution_estimator.1} parent=11 // pred_fallthru
          _
        // Predicated region
        $region21: #{critical_distribution_estimator.1} parent=11 // pred_check
          %p340 = pneg %p141
        $region22: #{critical_distribution_estimator.1} parent=11 // pred_check_branch
          %342 = sbr.rel (%p340) target = $region24
        $region23: #{critical_distribution_estimator.1} parent=11 // pred_region
          _
        $region24: #{critical_distribution_estimator.1} parent=11 // pred_fallthru
          _
        // Predicated region
        $region25: #{critical_distribution_estimator.1} parent=11 // pred_check
          %p343 = pneg %p162
        $region26: #{critical_distribution_estimator.1} parent=11 // pred_check_branch
          %345 = sbr.rel (%p343) target = $region28
        $region27: #{critical_distribution_estimator.1} parent=11 // pred_region
          _
        $region28: #{critical_distribution_estimator.1} parent=11 // pred_fallthru
          _
        // Predicated region
        $region29: #{critical_distribution_estimator.1} parent=11 // pred_check
          %p346 = pneg %p183
        $region30: #{critical_distribution_estimator.1} parent=11 // pred_check_branch
          %348 = sbr.rel (%p346) target = $region32
        $region31: #{critical_distribution_estimator.1} parent=11 // pred_region
          _
        $region32: #{critical_distribution_estimator.1} parent=11 // pred_fallthru
          _
        // Predicated region
        $region33: #{critical_distribution_estimator.1} parent=11 // pred_check
          %p349 = pneg %p204
        $region34: #{critical_distribution_estimator.1} parent=11 // pred_check_branch
          %351 = sbr.rel (%p349) target = $region36
        $region35: #{critical_distribution_estimator.1} parent=11 // pred_region
          _
        $region36: #{critical_distribution_estimator.1} parent=11 // pred_fallthru
          _
        // Predicated region
        $region37: #{critical_distribution_estimator.1} parent=11 // pred_check
          %p352 = pneg %p225
        $region38: #{critical_distribution_estimator.1} parent=11 // pred_check_branch
          %354 = sbr.rel (%p352) target = $region40
        $region39: #{critical_distribution_estimator.1} parent=11 // pred_region
          _
        $region40: #{critical_distribution_estimator.1} parent=11 // pred_fallthru
          _
        // Predicated region
        $region41: #{critical_distribution_estimator.1} parent=11 // pred_check
          %p355 = pneg %p246
        $region42: #{critical_distribution_estimator.1} parent=11 // pred_check_branch
          %357 = sbr.rel (%p355) target = $region44
        $region43: #{critical_distribution_estimator.1} parent=11 // pred_region
          _
        $region44: #{critical_distribution_estimator.1} parent=11 // pred_fallthru
          _
        // Predicated region
        $region45: #{critical_distribution_estimator.1} parent=11 // pred_check
          %p358 = pneg %p267
        $region46: #{critical_distribution_estimator.1} parent=11 // pred_check_branch
          %360 = sbr.rel (%p358) target = $region48
        $region47: #{critical_distribution_estimator.1} parent=11 // pred_region
          _
        $region48: #{critical_distribution_estimator.1} parent=11 // pred_fallthru
          _
      $region12: #{critical_distribution_estimator.1} parent=5 // pred_fallthru
        _
      %p361 = scmp.lt.s32.totalorder %s26, 2
      // Predicated region
      $region49: #{critical_distribution_estimator.1} parent=5 // pred_check
        %p362 = pneg %p361
      $region50: #{critical_distribution_estimator.1} parent=5 // pred_check_branch
        %364 = sbr.rel (%p362) target = $region52
      $region51: #{critical_distribution_estimator.1} parent=5 // pred_region
        // Predicated region
        $region53: #{critical_distribution_estimator.1} parent=51 // pred_check
          %p365 = pneg %p67
        $region54: #{critical_distribution_estimator.1} parent=51 // pred_check_branch
          %367 = sbr.rel (%p365) target = $region56
        $region55: #{critical_distribution_estimator.1} parent=51 // pred_region
          %p368 = scmp.lt.s32.totalorder %s26, 1
          %s369 = scalar_select %p368, %s26, 1
          %s370 = smul.addr %s369, 8
          %s371 = scalar_lea.vmem %s1, %s370
        $region56: #{critical_distribution_estimator.1} parent=51 // pred_fallthru
          _
        // Predicated region
        $region57: #{critical_distribution_estimator.1} parent=51 // pred_check
          %p372 = pneg %p93
        $region58: #{critical_distribution_estimator.1} parent=51 // pred_check_branch
          %374 = sbr.rel (%p372) target = $region60
        $region59: #{critical_distribution_estimator.1} parent=51 // pred_region
          %p375 = scmp.lt.s32.totalorder %s26, 1
          %s376 = scalar_select %p375, %s26, 1
          %s377 = smul.addr %s376, 8
          %s378 = scalar_lea.vmem %s2, %s377
        $region60: #{critical_distribution_estimator.1} parent=51 // pred_fallthru
          _
      $region52: #{critical_distribution_estimator.1} parent=5 // pred_fallthru
        _
      %p379 = scmp.le.s32.totalorder 1, %s26
      %p380 = scmp.lt.s32.totalorder %s26, 3
      %p381 = pnand %p379, %p380
      %p382 = pneg %p381
      // Predicated region
      $region61: #{critical_distribution_estimator.1} parent=5 // pred_check
        _
      $region62: #{critical_distribution_estimator.1} parent=5 // pred_check_branch
        %384 = sbr.rel (%p381) target = $region64
      $region63: #{critical_distribution_estimator.1} parent=5 // pred_region
        %s385 = ssub.s32 %s26, 1
        %p386 = pneg %p47
        %p387 = pneg %p44
        %p388 = scmp.lt.s32.totalorder %s31, 1
        %s389 = scalar_select %p388, %s31, 1
        %s390 = smul.addr %s389, 8
        %s391 = scalar_lea.vmem %s1, %s390
        %p392 = pneg %p73
        %p393 = pneg %p70
        %p394 = scmp.lt.s32.totalorder %s31, 1
        %s395 = scalar_select %p394, %s31, 1
        %s396 = smul.addr %s395, 8
        %s397 = scalar_lea.vmem %s2, %s396
        %p398 = pneg %p99
        %p399 = pneg %p96
        %p400 = pneg %p120
        %p401 = pneg %p117
        %p402 = pneg %p141
        %p403 = pneg %p138
        %p404 = pneg %p162
        %p405 = pneg %p159
        %p406 = pneg %p183
        %p407 = pneg %p180
        %p408 = pneg %p204
        %p409 = pneg %p201
        %p410 = pneg %p225
        %p411 = pneg %p222
        %p412 = pneg %p246
        %p413 = pneg %p243
        %p414 = pneg %p267
        %p415 = pneg %p264
        %p416 = pneg %p293
        %p417 = pneg %p290
        %s418 = sand.u32 %s280, 1
        %s419 = scalar_lea.sflag [#allocation4], %s418
        %s420 = sand.u32 %s280, 1
        %s421 = smul.addr %s420, 8
        %s422 = scalar_lea.vmem [#allocation3], %s421
        %p423 = pneg %p319
        %p424 = pneg %p316
        %s425 = sand.u32 %s306, 1
        %s426 = scalar_lea.sflag [#allocation6], %s425
        %s427 = sand.u32 %s306, 1
        %s428 = smul.addr %s427, 8
        %s429 = scalar_lea.vmem [#allocation5], %s428
        %p430 = scmp.lt.s32.totalorder %s31, 1
        %s431 = scalar_select %p430, %s31, 1
        %s432 = smul.addr %s431, 8
        %s433 = scalar_lea.vmem %s1, %s432
        %p434 = scmp.lt.s32.totalorder %s31, 1
        %s435 = scalar_select %p434, %s31, 1
        %s436 = smul.addr %s435, 8
        %s437 = scalar_lea.vmem %s2, %s436
        %v438 = vld [vmem:[%s433] sm:$0xff]
        %v439 = vld [vmem:[%s437] sm:$0xff]
        %v440 = vld [vmem:[%s3] sm:$0xff]
        %v441 = vld [vmem:[%s3 + $0x8] sm:$0xff]
        %v442 = vld [vmem:[%s3 + $0x10] sm:$0xff]
        %v443 = vld [vmem:[%s3 + $0x18] sm:$0xff]
        %v444 = vld [vmem:[%s4] sm:$0x1]
        %v446 = vlaneseq
        %v447 = vshrl.u32 %v446, 7
        %v448 = vsub.s32 0, %v447
        %v449 = vrot.slane %v444, %v448
        %vm451 = vcmask 261120
        %v453 = vsel %vm451, %v438, 0
        %455 = vmatprep.subr.mxu0 0.0
        %456 = vmatpush1.msra.mxu0 0.0
        %457 = vmatprep.subr.mxu0 0.0
        %458 = vmatpush1.msra.mxu0 0.0
        %459 = vmatprep.subr.mxu0 0.0
        %460 = vmatpush1.msra.mxu0 0.0
        %461 = vmatprep.subr.mxu0 0.0
        %462 = vmatpush1.msra.mxu0 0.0
        %463 = vmatprep.subr.mxu0 0.0
        %464 = vmatpush1.msra.mxu0 0.0
        %465 = vmatprep.subr.mxu0 0.0
        %466 = vmatpush1.msra.mxu0 0.0
        %467 = vmatprep.subr.mxu0 0.0
        %468 = vmatpush1.msra.mxu0 0.0
        %469 = vmatprep.subr.mxu0 0.0
        %470 = vmatpush1.msra.mxu0 0.0
        %471 = vmatprep.subr.mxu0 0.0
        %472 = vmatpush1.msra.mxu0 0.0
        %473 = vmatprep.subr.mxu0 0.0
        %474 = vmatpush1.msra.mxu0 0.0
        %475 = vmatprep.subr.mxu0 0.0
        %476 = vmatpush1.msra.mxu0 0.0
        %477 = vmatprep.subr.mxu0 0.0
        %478 = vmatpush1.msra.mxu0 0.0
        %479 = vmatprep.subr.mxu0 0.0
        %480 = vmatpush1.msra.mxu0 %v443
        %481 = vmatprep.subr.mxu0 0.0
        %482 = vmatpush1.msra.mxu0 %v442
        %483 = vmatprep.subr.mxu0 0.0
        %484 = vmatpush1.msra.mxu0 %v441
        %485 = vmatprep.subr.mxu0 0.0
        %486 = vmatpush1.msra.mxu0 %v440
        %487 = vmatprep.subr.mxu0 0.0
        %488 = vmatpush2.msra.mxu0 0.0
        %489 = vmatprep.subr.mxu0 0.0
        %490 = vmatpush2.msra.mxu0 0.0
        %491 = vmatprep.subr.mxu0 0.0
        %492 = vmatpush2.msra.mxu0 0.0
        %493 = vmatprep.subr.mxu0 0.0
        %494 = vmatpush2.msra.mxu0 0.0
        %495 = vmatprep.subr.mxu0 0.0
        %496 = vmatpush2.msra.mxu0 0.0
        %497 = vmatprep.subr.mxu0 0.0
        %498 = vmatpush2.msra.mxu0 0.0
        %499 = vmatprep.subr.mxu0 0.0
        %500 = vmatpush2.msra.mxu0 0.0
        %501 = vmatprep.subr.mxu0 0.0
        %502 = vmatpush2.msra.mxu0 0.0
        %503 = vmatprep.subr.mxu0 0.0
        %504 = vmatpush2.msra.mxu0 0.0
        %505 = vmatprep.subr.mxu0 0.0
        %506 = vmatpush2.msra.mxu0 0.0
        %507 = vmatprep.subr.mxu0 0.0
        %508 = vmatpush2.msra.mxu0 0.0
        %509 = vmatprep.subr.mxu0 0.0
        %510 = vmatpush2.msra.mxu0 0.0
        %511 = vmatprep.subr.mxu0 0.0
        %512 = vmatpush2.msra.mxu0 0.0
        %513 = vmatprep.subr.mxu0 0.0
        %514 = vmatpush2.msra.mxu0 0.0
        %515 = vmatprep.subr.mxu0 0.0
        %516 = vmatpush2.msra.mxu0 0.0
        %517 = vmatprep.subr.mxu0 0.0
        %518 = vmatpush2.msra.mxu0 0.0
        %519 = vmatprep.mubr.f32.mxu0 0.0
        %520 = vmatmul.mubr.f32.gmra.mxu0 %v453
        %v521 = vpop.f32.mrf.mxu0
        %v522 = vadd.f32 %v449, %v521
        %v523 = vpop.f32.mrf.mxu0
        %524 = vdwg.mxu0
        %v525 = vld [vmem:[%s5] sm:$0xff]
        %v526 = vld [vmem:[%s5 + $0x8] sm:$0xff]
        %v527 = vld [vmem:[%s5 + $0x10] sm:$0xff]
        %v528 = vld [vmem:[%s5 + $0x18] sm:$0xff]
        %v529 = vld [vmem:[%s6] sm:$0x1]
        %v531 = vlaneseq
        %v532 = vshrl.u32 %v531, 7
        %v533 = vsub.s32 0, %v532
        %v534 = vrot.slane %v529, %v533
        %v537 = vsel %vm451, %v439, 0
        %539 = vmatprep.subr.mxu0 0.0
        %540 = vmatpush1.msra.mxu0 0.0
        %541 = vmatprep.subr.mxu0 0.0
        %542 = vmatpush1.msra.mxu0 0.0
        %543 = vmatprep.subr.mxu0 0.0
        %544 = vmatpush1.msra.mxu0 0.0
        %545 = vmatprep.subr.mxu0 0.0
        %546 = vmatpush1.msra.mxu0 0.0
        %547 = vmatprep.subr.mxu0 0.0
        %548 = vmatpush1.msra.mxu0 0.0
        %549 = vmatprep.subr.mxu0 0.0
        %550 = vmatpush1.msra.mxu0 0.0
        %551 = vmatprep.subr.mxu0 0.0
        %552 = vmatpush1.msra.mxu0 0.0
        %553 = vmatprep.subr.mxu0 0.0
        %554 = vmatpush1.msra.mxu0 0.0
        %555 = vmatprep.subr.mxu0 0.0
        %556 = vmatpush1.msra.mxu0 0.0
        %557 = vmatprep.subr.mxu0 0.0
        %558 = vmatpush1.msra.mxu0 0.0
        %559 = vmatprep.subr.mxu0 0.0
        %560 = vmatpush1.msra.mxu0 0.0
        %561 = vmatprep.subr.mxu0 0.0
        %562 = vmatpush1.msra.mxu0 0.0
        %563 = vmatprep.subr.mxu0 0.0
        %564 = vmatpush1.msra.mxu0 %v528
        %565 = vmatprep.subr.mxu0 0.0
        %566 = vmatpush1.msra.mxu0 %v527
        %567 = vmatprep.subr.mxu0 0.0
        %568 = vmatpush1.msra.mxu0 %v526
        %569 = vmatprep.subr.mxu0 0.0
        %570 = vmatpush1.msra.mxu0 %v525
        %571 = vmatprep.subr.mxu0 0.0
        %572 = vmatpush2.msra.mxu0 0.0
        %573 = vmatprep.subr.mxu0 0.0
        %574 = vmatpush2.msra.mxu0 0.0
        %575 = vmatprep.subr.mxu0 0.0
        %576 = vmatpush2.msra.mxu0 0.0
        %577 = vmatprep.subr.mxu0 0.0
        %578 = vmatpush2.msra.mxu0 0.0
        %579 = vmatprep.subr.mxu0 0.0
        %580 = vmatpush2.msra.mxu0 0.0
        %581 = vmatprep.subr.mxu0 0.0
        %582 = vmatpush2.msra.mxu0 0.0
        %583 = vmatprep.subr.mxu0 0.0
        %584 = vmatpush2.msra.mxu0 0.0
        %585 = vmatprep.subr.mxu0 0.0
        %586 = vmatpush2.msra.mxu0 0.0
        %587 = vmatprep.subr.mxu0 0.0
        %588 = vmatpush2.msra.mxu0 0.0
        %589 = vmatprep.subr.mxu0 0.0
        %590 = vmatpush2.msra.mxu0 0.0
        %591 = vmatprep.subr.mxu0 0.0
        %592 = vmatpush2.msra.mxu0 0.0
        %593 = vmatprep.subr.mxu0 0.0
        %594 = vmatpush2.msra.mxu0 0.0
        %595 = vmatprep.subr.mxu0 0.0
        %596 = vmatpush2.msra.mxu0 0.0
        %597 = vmatprep.subr.mxu0 0.0
        %598 = vmatpush2.msra.mxu0 0.0
        %599 = vmatprep.subr.mxu0 0.0
        %600 = vmatpush2.msra.mxu0 0.0
        %601 = vmatprep.subr.mxu0 0.0
        %602 = vmatpush2.msra.mxu0 0.0
        %603 = vmatprep.mubr.f32.mxu0 0.0
        %604 = vmatmul.mubr.f32.gmra.mxu0 %v537
        %v605 = vpop.f32.mrf.mxu0
        %v606 = vadd.f32 %v534, %v605
        %v607 = vpop.f32.mrf.mxu0
        %608 = vdwg.mxu0
        %610 = vrot.lane.b32.xlu0 %v606, 96
        %v611 = vpop.permute.xlu0 %610
        %v613 = vadd.f32 %v522, %v611
        %v614 = vmul.f32 %v613, 0.5
        %v615 = vmul.f32 %v613, 0.044715
        %v616 = vmul.f32 %v615, %v613
        %v617 = vmul.f32 %v616, %v613
        %v618 = vadd.f32 %v613, %v617
        %v619 = vmul.f32 %v618, 0.7978846
        %v620 = vtanh.pop %v619
        %v621 = vadd.f32 %v620, 1.0
        %v622 = vmul.f32 %v614, %v621
        %v623 = vld [vmem:[%s7] sm:$0xff]
        %v624 = vld [vmem:[%s7 + $0x8] sm:$0xff]
        %v625 = vld [vmem:[%s7 + $0x10] sm:$0xff]
        %v626 = vld [vmem:[%s7 + $0x18] sm:$0xff]
        %v627 = vld [vmem:[%s8] sm:$0x1]
        %v629 = vlaneseq
        %v630 = vshrl.u32 %v629, 7
        %v631 = vsub.s32 0, %v630
        %v632 = vrot.slane %v627, %v631
        %635 = vrot.lane.b32.xlu0 %v622, 96
        %v636 = vpop.permute.xlu0 %635
        %v637 = vsel %vm451, %v636, 0
        %639 = vmatprep.subr.mxu0 0.0
        %640 = vmatpush1.msra.mxu0 0.0
        %641 = vmatprep.subr.mxu0 0.0
        %642 = vmatpush1.msra.mxu0 0.0
        %643 = vmatprep.subr.mxu0 0.0
        %644 = vmatpush1.msra.mxu0 0.0
        %645 = vmatprep.subr.mxu0 0.0
        %646 = vmatpush1.msra.mxu0 0.0
        %647 = vmatprep.subr.mxu0 0.0
        %648 = vmatpush1.msra.mxu0 0.0
        %649 = vmatprep.subr.mxu0 0.0
        %650 = vmatpush1.msra.mxu0 0.0
        %651 = vmatprep.subr.mxu0 0.0
        %652 = vmatpush1.msra.mxu0 0.0
        %653 = vmatprep.subr.mxu0 0.0
        %654 = vmatpush1.msra.mxu0 0.0
        %655 = vmatprep.subr.mxu0 0.0
        %656 = vmatpush1.msra.mxu0 0.0
        %657 = vmatprep.subr.mxu0 0.0
        %658 = vmatpush1.msra.mxu0 0.0
        %659 = vmatprep.subr.mxu0 0.0
        %660 = vmatpush1.msra.mxu0 0.0
        %661 = vmatprep.subr.mxu0 0.0
        %662 = vmatpush1.msra.mxu0 0.0
        %663 = vmatprep.subr.mxu0 0.0
        %664 = vmatpush1.msra.mxu0 %v626
        %665 = vmatprep.subr.mxu0 0.0
        %666 = vmatpush1.msra.mxu0 %v625
        %667 = vmatprep.subr.mxu0 0.0
        %668 = vmatpush1.msra.mxu0 %v624
        %669 = vmatprep.subr.mxu0 0.0
        %670 = vmatpush1.msra.mxu0 %v623
        %671 = vmatprep.subr.mxu0 0.0
        %672 = vmatpush2.msra.mxu0 0.0
        %673 = vmatprep.subr.mxu0 0.0
        %674 = vmatpush2.msra.mxu0 0.0
        %675 = vmatprep.subr.mxu0 0.0
        %676 = vmatpush2.msra.mxu0 0.0
        %677 = vmatprep.subr.mxu0 0.0
        %678 = vmatpush2.msra.mxu0 0.0
        %679 = vmatprep.subr.mxu0 0.0
        %680 = vmatpush2.msra.mxu0 0.0
        %681 = vmatprep.subr.mxu0 0.0
        %682 = vmatpush2.msra.mxu0 0.0
        %683 = vmatprep.subr.mxu0 0.0
        %684 = vmatpush2.msra.mxu0 0.0
        %685 = vmatprep.subr.mxu0 0.0
        %686 = vmatpush2.msra.mxu0 0.0
        %687 = vmatprep.subr.mxu0 0.0
        %688 = vmatpush2.msra.mxu0 0.0
        %689 = vmatprep.subr.mxu0 0.0
        %690 = vmatpush2.msra.mxu0 0.0
        %691 = vmatprep.subr.mxu0 0.0
        %692 = vmatpush2.msra.mxu0 0.0
        %693 = vmatprep.subr.mxu0 0.0
        %694 = vmatpush2.msra.mxu0 0.0
        %695 = vmatprep.subr.mxu0 0.0
        %696 = vmatpush2.msra.mxu0 0.0
        %697 = vmatprep.subr.mxu0 0.0
        %698 = vmatpush2.msra.mxu0 0.0
        %699 = vmatprep.subr.mxu0 0.0
        %700 = vmatpush2.msra.mxu0 0.0
        %701 = vmatprep.subr.mxu0 0.0
        %702 = vmatpush2.msra.mxu0 0.0
        %703 = vmatprep.mubr.f32.mxu0 0.0
        %704 = vmatmul.mubr.f32.gmra.mxu0 %v637
        %v705 = vpop.f32.mrf.mxu0
        %v706 = vadd.f32 %v632, %v705
        %v707 = vpop.f32.mrf.mxu0
        %708 = vdwg.mxu0
        %v709 = vmax.f32 %v706, 0.0
        %v710 = vand.u32 2147483647, %v706
        %v711 = vsub.f32 0.0, %v710
        %v712 = vmul.f32 %v711, 1.442695
        %v713 = vpow.pop %v712
        %v714 = vadd.f32 %v713, 1.0
        %v715 = vlog2.pop %v714
        %v716 = vmul.f32 %v715, 0.6931472
        %v717 = vadd.f32 %v709, %v716
        %v719 = vsel %vm451, %v522, 0
        %v721 = vsel %vm451, %v606, 0
        %723 = vmatprep.subr.mxu0 0.0
        %724 = vmatpush1.xpose.msra.mxu0 0.0
        %725 = vmatprep.subr.mxu0 0.0
        %726 = vmatpush1.xpose.msra.mxu0 0.0
        %727 = vmatprep.subr.mxu0 0.0
        %728 = vmatpush1.xpose.msra.mxu0 0.0
        %729 = vmatprep.subr.mxu0 0.0
        %730 = vmatpush1.xpose.msra.mxu0 0.0
        %731 = vmatprep.subr.mxu0 0.0
        %732 = vmatpush1.xpose.msra.mxu0 0.0
        %733 = vmatprep.subr.mxu0 0.0
        %734 = vmatpush1.xpose.msra.mxu0 0.0
        %735 = vmatprep.subr.mxu0 0.0
        %736 = vmatpush1.xpose.msra.mxu0 0.0
        %737 = vmatprep.subr.mxu0 0.0
        %738 = vmatpush1.xpose.msra.mxu0 0.0
        %739 = vmatprep.subr.mxu0 0.0
        %740 = vmatpush1.xpose.msra.mxu0 0.0
        %741 = vmatprep.subr.mxu0 0.0
        %742 = vmatpush1.xpose.msra.mxu0 0.0
        %743 = vmatprep.subr.mxu0 0.0
        %744 = vmatpush1.xpose.msra.mxu0 0.0
        %745 = vmatprep.subr.mxu0 0.0
        %746 = vmatpush1.xpose.msra.mxu0 0.0
        %747 = vmatprep.subr.mxu0 0.0
        %748 = vmatpush1.xpose.msra.mxu0 0.0
        %749 = vmatprep.subr.mxu0 0.0
        %750 = vmatpush1.xpose.msra.mxu0 0.0
        %751 = vmatprep.subr.mxu0 0.0
        %752 = vmatpush1.xpose.msra.mxu0 0.0
        %753 = vmatprep.subr.mxu0 0.0
        %754 = vmatpush1.xpose.msra.mxu0 %v721
        %755 = vmatprep.subr.mxu0 0.0
        %756 = vmatpush2.xpose.msra.mxu0 0.0
        %757 = vmatprep.subr.mxu0 0.0
        %758 = vmatpush2.xpose.msra.mxu0 0.0
        %759 = vmatprep.subr.mxu0 0.0
        %760 = vmatpush2.xpose.msra.mxu0 0.0
        %761 = vmatprep.subr.mxu0 0.0
        %762 = vmatpush2.xpose.msra.mxu0 0.0
        %763 = vmatprep.subr.mxu0 0.0
        %764 = vmatpush2.xpose.msra.mxu0 0.0
        %765 = vmatprep.subr.mxu0 0.0
        %766 = vmatpush2.xpose.msra.mxu0 0.0
        %767 = vmatprep.subr.mxu0 0.0
        %768 = vmatpush2.xpose.msra.mxu0 0.0
        %769 = vmatprep.subr.mxu0 0.0
        %770 = vmatpush2.xpose.msra.mxu0 0.0
        %771 = vmatprep.subr.mxu0 0.0
        %772 = vmatpush2.xpose.msra.mxu0 0.0
        %773 = vmatprep.subr.mxu0 0.0
        %774 = vmatpush2.xpose.msra.mxu0 0.0
        %775 = vmatprep.subr.mxu0 0.0
        %776 = vmatpush2.xpose.msra.mxu0 0.0
        %777 = vmatprep.subr.mxu0 0.0
        %778 = vmatpush2.xpose.msra.mxu0 0.0
        %779 = vmatprep.subr.mxu0 0.0
        %780 = vmatpush2.xpose.msra.mxu0 0.0
        %781 = vmatprep.subr.mxu0 0.0
        %782 = vmatpush2.xpose.msra.mxu0 0.0
        %783 = vmatprep.subr.mxu0 0.0
        %784 = vmatpush2.xpose.msra.mxu0 0.0
        %785 = vmatprep.subr.mxu0 0.0
        %786 = vmatpush2.xpose.msra.mxu0 0.0
        %787 = vmatprep.mubr.f32.mxu0 0.0
        %788 = vmatmul.mubr.f32.gmra.mxu0 %v719
        %v789 = vpop.f32.mrf.mxu0
        %v790 = vadd.f32 0.0, %v789
        %v791 = vpop.f32.mrf.mxu0
        %792 = vdwg.mxu0
        %v793 = vmul.f32 %v790, 0.17677669
        %vm794 = vcmask 64512
        %v795 = vsel %vm794, %v793, -inf
        %796 = vmax.xlane.f32.xlu0 %v795
        %v797 = vpop.xlane.xlu0 %796
        %v798 = vsub.f32 %v793, %v797
        %v799 = vmul.f32 %v798, 1.442695
        %v800 = vpow.pop %v799
        %v801 = vsel %vm794, %v800, 0.0
        %802 = vadd.xlane.f32.xlu0 %v801
        %v803 = vpop.xlane.xlu0 %802
        %v804 = vrcp.pop %v803
        %v805 = vmul.f32 %v800, %v804
        %v807 = vsel %vm794, %v805, 0
        %809 = vmatprep.subr.mxu0 0.0
        %810 = vmatpush1.msra.mxu0 0.0
        %811 = vmatprep.subr.mxu0 0.0
        %812 = vmatpush1.msra.mxu0 0.0
        %813 = vmatprep.subr.mxu0 0.0
        %814 = vmatpush1.msra.mxu0 0.0
        %815 = vmatprep.subr.mxu0 0.0
        %816 = vmatpush1.msra.mxu0 0.0
        %817 = vmatprep.subr.mxu0 0.0
        %818 = vmatpush1.msra.mxu0 0.0
        %819 = vmatprep.subr.mxu0 0.0
        %820 = vmatpush1.msra.mxu0 0.0
        %821 = vmatprep.subr.mxu0 0.0
        %822 = vmatpush1.msra.mxu0 0.0
        %823 = vmatprep.subr.mxu0 0.0
        %824 = vmatpush1.msra.mxu0 0.0
        %825 = vmatprep.subr.mxu0 0.0
        %826 = vmatpush1.msra.mxu0 0.0
        %827 = vmatprep.subr.mxu0 0.0
        %828 = vmatpush1.msra.mxu0 0.0
        %829 = vmatprep.subr.mxu0 0.0
        %830 = vmatpush1.msra.mxu0 0.0
        %831 = vmatprep.subr.mxu0 0.0
        %832 = vmatpush1.msra.mxu0 0.0
        %833 = vmatprep.subr.mxu0 0.0
        %834 = vmatpush1.msra.mxu0 0.0
        %835 = vmatprep.subr.mxu0 0.0
        %836 = vmatpush1.msra.mxu0 0.0
        %837 = vmatprep.subr.mxu0 0.0
        %838 = vmatpush1.msra.mxu0 0.0
        %839 = vmatprep.subr.mxu0 0.0
        %840 = vmatpush1.msra.mxu0 %v611
        %841 = vmatprep.subr.mxu0 0.0
        %842 = vmatpush2.msra.mxu0 0.0
        %843 = vmatprep.subr.mxu0 0.0
        %844 = vmatpush2.msra.mxu0 0.0
        %845 = vmatprep.subr.mxu0 0.0
        %846 = vmatpush2.msra.mxu0 0.0
        %847 = vmatprep.subr.mxu0 0.0
        %848 = vmatpush2.msra.mxu0 0.0
        %849 = vmatprep.subr.mxu0 0.0
        %850 = vmatpush2.msra.mxu0 0.0
        %851 = vmatprep.subr.mxu0 0.0
        %852 = vmatpush2.msra.mxu0 0.0
        %853 = vmatprep.subr.mxu0 0.0
        %854 = vmatpush2.msra.mxu0 0.0
        %855 = vmatprep.subr.mxu0 0.0
        %856 = vmatpush2.msra.mxu0 0.0
        %857 = vmatprep.subr.mxu0 0.0
        %858 = vmatpush2.msra.mxu0 0.0
        %859 = vmatprep.subr.mxu0 0.0
        %860 = vmatpush2.msra.mxu0 0.0
        %861 = vmatprep.subr.mxu0 0.0
        %862 = vmatpush2.msra.mxu0 0.0
        %863 = vmatprep.subr.mxu0 0.0
        %864 = vmatpush2.msra.mxu0 0.0
        %865 = vmatprep.subr.mxu0 0.0
        %866 = vmatpush2.msra.mxu0 0.0
        %867 = vmatprep.subr.mxu0 0.0
        %868 = vmatpush2.msra.mxu0 0.0
        %869 = vmatprep.subr.mxu0 0.0
        %870 = vmatpush2.msra.mxu0 0.0
        %871 = vmatprep.subr.mxu0 0.0
        %872 = vmatpush2.msra.mxu0 0.0
        %873 = vmatprep.mubr.f32.mxu0 0.0
        %874 = vmatmul.mubr.f32.gmra.mxu0 %v807
        %v875 = vpop.f32.mrf.mxu0
        %v876 = vadd.f32 0.0, %v875
        %v877 = vpop.f32.mrf.mxu0
        %878 = vdwg.mxu0
        %v879 = vld [vmem:[%s9] sm:$0xff]
        %v880 = vld [vmem:[%s9 + $0x8] sm:$0xff]
        %v881 = vld [vmem:[%s9 + $0x10] sm:$0xff]
        %v882 = vld [vmem:[%s9 + $0x18] sm:$0xff]
        %v883 = vld [vmem:[%s10] sm:$0x1]
        %v885 = vlaneseq
        %v886 = vshrl.u32 %v885, 7
        %v887 = vsub.s32 0, %v886
        %v888 = vrot.slane %v883, %v887
        %v891 = vsel %vm451, %v876, 0
        %893 = vmatprep.subr.mxu0 0.0
        %894 = vmatpush1.msra.mxu0 0.0
        %895 = vmatprep.subr.mxu0 0.0
        %896 = vmatpush1.msra.mxu0 0.0
        %897 = vmatprep.subr.mxu0 0.0
        %898 = vmatpush1.msra.mxu0 0.0
        %899 = vmatprep.subr.mxu0 0.0
        %900 = vmatpush1.msra.mxu0 0.0
        %901 = vmatprep.subr.mxu0 0.0
        %902 = vmatpush1.msra.mxu0 0.0
        %903 = vmatprep.subr.mxu0 0.0
        %904 = vmatpush1.msra.mxu0 0.0
        %905 = vmatprep.subr.mxu0 0.0
        %906 = vmatpush1.msra.mxu0 0.0
        %907 = vmatprep.subr.mxu0 0.0
        %908 = vmatpush1.msra.mxu0 0.0
        %909 = vmatprep.subr.mxu0 0.0
        %910 = vmatpush1.msra.mxu0 0.0
        %911 = vmatprep.subr.mxu0 0.0
        %912 = vmatpush1.msra.mxu0 0.0
        %913 = vmatprep.subr.mxu0 0.0
        %914 = vmatpush1.msra.mxu0 0.0
        %915 = vmatprep.subr.mxu0 0.0
        %916 = vmatpush1.msra.mxu0 0.0
        %917 = vmatprep.subr.mxu0 0.0
        %918 = vmatpush1.msra.mxu0 %v882
        %919 = vmatprep.subr.mxu0 0.0
        %920 = vmatpush1.msra.mxu0 %v881
        %921 = vmatprep.subr.mxu0 0.0
        %922 = vmatpush1.msra.mxu0 %v880
        %923 = vmatprep.subr.mxu0 0.0
        %924 = vmatpush1.msra.mxu0 %v879
        %925 = vmatprep.subr.mxu0 0.0
        %926 = vmatpush2.msra.mxu0 0.0
        %927 = vmatprep.subr.mxu0 0.0
        %928 = vmatpush2.msra.mxu0 0.0
        %929 = vmatprep.subr.mxu0 0.0
        %930 = vmatpush2.msra.mxu0 0.0
        %931 = vmatprep.subr.mxu0 0.0
        %932 = vmatpush2.msra.mxu0 0.0
        %933 = vmatprep.subr.mxu0 0.0
        %934 = vmatpush2.msra.mxu0 0.0
        %935 = vmatprep.subr.mxu0 0.0
        %936 = vmatpush2.msra.mxu0 0.0
        %937 = vmatprep.subr.mxu0 0.0
        %938 = vmatpush2.msra.mxu0 0.0
        %939 = vmatprep.subr.mxu0 0.0
        %940 = vmatpush2.msra.mxu0 0.0
        %941 = vmatprep.subr.mxu0 0.0
        %942 = vmatpush2.msra.mxu0 0.0
        %943 = vmatprep.subr.mxu0 0.0
        %944 = vmatpush2.msra.mxu0 0.0
        %945 = vmatprep.subr.mxu0 0.0
        %946 = vmatpush2.msra.mxu0 0.0
        %947 = vmatprep.subr.mxu0 0.0
        %948 = vmatpush2.msra.mxu0 0.0
        %949 = vmatprep.subr.mxu0 0.0
        %950 = vmatpush2.msra.mxu0 0.0
        %951 = vmatprep.subr.mxu0 0.0
        %952 = vmatpush2.msra.mxu0 0.0
        %953 = vmatprep.subr.mxu0 0.0
        %954 = vmatpush2.msra.mxu0 0.0
        %955 = vmatprep.subr.mxu0 0.0
        %956 = vmatpush2.msra.mxu0 0.0
        %957 = vmatprep.mubr.f32.mxu0 0.0
        %958 = vmatmul.mubr.f32.gmra.mxu0 %v891
        %v959 = vpop.f32.mrf.mxu0
        %v960 = vadd.f32 %v888, %v959
        %v961 = vpop.f32.mrf.mxu0
        %962 = vdwg.mxu0
        %s963 = sld [smem:[#allocation2]]
        %s964 = smax.f32 %s963, 0.001
        %v965 = vstv %s964
        %v966 = vmul.f32 %v965, %v717
        %v967 = vrcp.pop %v966
        %v968 = vmul.f32 %v960, %v967
        %v969 = vsel %vm451, %v968, -inf
        %970 = vmax.xlane.f32.xlu0 %v969
        %v971 = vpop.xlane.xlu0 %970
        %v972 = vsub.f32 %v968, %v971
        %v973 = vmul.f32 %v972, 1.442695
        %v974 = vpow.pop %v973
        %v975 = vsel %vm451, %v974, 0.0
        %976 = vadd.xlane.f32.xlu0 %v975
        %v977 = vpop.xlane.xlu0 %976
        %v978 = vrcp.pop %v977
        %v979 = vmul.f32 %v974, %v978
        %980 = vst.msk [vmem:[%s422] sm:$0xff] %vm451, %v979
        %981 = vst.msk [vmem:[%s429] sm:$0xff] %vm451, %v717
        %s982 = sand.u32 %s280, 1
        %s983 = scalar_lea.sflag [#allocation4], %s982
        %s984 = sand.u32 %s280, 1
        %s985 = smul.addr %s984, 8
        %s986 = scalar_lea.vmem [#allocation3], %s985
        %s987 = sand.u32 %s306, 1
        %s988 = scalar_lea.sflag [#allocation6], %s987
        %s989 = sand.u32 %s306, 1
        %s990 = smul.addr %s989, 8
        %s991 = scalar_lea.vmem [#allocation5], %s990
        // Predicated region
        $region65: #{critical_distribution_estimator.1} parent=63 // pred_check
          %p992 = pneg %p290
        $region66: #{critical_distribution_estimator.1} parent=63 // pred_check_branch
          %994 = sbr.rel (%p992) target = $region68
        $region67: #{critical_distribution_estimator.1} parent=63 // pred_region
          %s996 = ssub.s32 128, 128
          %997 = vsyncadd %s983, %s996
          %s998 = smul.addr %s31, 128
          %s999 = scalar_lea.hbm %s11, %s998
          %s1001 = sshll.u32 %s986, 4
          %s1002 = int_to_ptr.vmem [resolvable:$true] %s1001
          %1004 = dma.vmem_to_hbm [thread:$0]  %s1002, 128, %s999, %s983
        $region68: #{critical_distribution_estimator.1} parent=63 // pred_fallthru
          _
        // Predicated region
        $region69: #{critical_distribution_estimator.1} parent=63 // pred_check
          %p1005 = pneg %p316
        $region70: #{critical_distribution_estimator.1} parent=63 // pred_check_branch
          %1007 = sbr.rel (%p1005) target = $region72
        $region71: #{critical_distribution_estimator.1} parent=63 // pred_region
          %s1009 = ssub.s32 128, 128
          %1010 = vsyncadd %s988, %s1009
          %s1011 = smul.addr %s31, 128
          %s1012 = scalar_lea.hbm %s12, %s1011
          %s1014 = sshll.u32 %s991, 4
          %s1015 = int_to_ptr.vmem [resolvable:$true] %s1014
          %1017 = dma.vmem_to_hbm [thread:$0]  %s1015, 128, %s1012, %s988
        $region72: #{critical_distribution_estimator.1} parent=63 // pred_fallthru
          _
      $region64: #{critical_distribution_estimator.1} parent=5 // pred_fallthru
        _
      %p1018 = scmp.le.s32.totalorder 2, %s26
      // Predicated region
      $region73: #{critical_distribution_estimator.1} parent=5 // pred_check
        %p1019 = pneg %p1018
      $region74: #{critical_distribution_estimator.1} parent=5 // pred_check_branch
        %1021 = sbr.rel (%p1019) target = $region76
      $region75: #{critical_distribution_estimator.1} parent=5 // pred_region
        %s1022 = ssub.s32 %s26, 2
        // Predicated region
        $region77: #{critical_distribution_estimator.1} parent=75 // pred_check
          %p1023 = pneg %p296
        $region78: #{critical_distribution_estimator.1} parent=75 // pred_check_branch
          %1025 = sbr.rel (%p1023) target = $region80
        $region79: #{critical_distribution_estimator.1} parent=75 // pred_region
          %s1026 = sand.u32 %s281, 1
          %s1027 = scalar_lea.sflag [#allocation4], %s1026
          %s1028 = sand.u32 %s281, 1
          %s1029 = smul.addr %s1028, 8
          %s1030 = scalar_lea.vmem [#allocation3], %s1029
          %1031 = dma.done %s1027, 128
        $region80: #{critical_distribution_estimator.1} parent=75 // pred_fallthru
          _
        // Predicated region
        $region81: #{critical_distribution_estimator.1} parent=75 // pred_check
          %p1032 = pneg %p322
        $region82: #{critical_distribution_estimator.1} parent=75 // pred_check_branch
          %1034 = sbr.rel (%p1032) target = $region84
        $region83: #{critical_distribution_estimator.1} parent=75 // pred_region
          %s1035 = sand.u32 %s307, 1
          %s1036 = scalar_lea.sflag [#allocation6], %s1035
          %s1037 = sand.u32 %s307, 1
          %s1038 = smul.addr %s1037, 8
          %s1039 = scalar_lea.vmem [#allocation5], %s1038
          %1040 = dma.done %s1036, 128
        $region84: #{critical_distribution_estimator.1} parent=75 // pred_fallthru
          _
      $region76: #{critical_distribution_estimator.1} parent=5 // pred_fallthru
        _
    $region6: #{critical_distribution_estimator.1} parent=1 // loop_footer
      %s30 = sadd.s32 1, %s26
    $region7: #{critical_distribution_estimator.1} parent=1 // loop_footer_branch
      %25 = sbr.rel target = $region3
    $region8: #{critical_distribution_estimator.1} parent=1 // loop_exit
      _
    %1041 = vsyncpa [#allocation4], 1
    %s1042 = scalar_lea.sflag [#allocation4], 1
    %1043 = vsyncpa %s1042, 1
    %1044 = vsyncpa [#allocation6], 1
    %s1045 = scalar_lea.sflag [#allocation6], 1
    %1046 = vsyncpa %s1045, 1

</llo_original>
